<compile_context>
chip_gen: v5e
topology: v5e:2x2
jax: 0.10.0
libtpu: 0.0.40
codegen_flags: <defaults>
</compile_context>

<pallas_src>
import functools

import jax
import jax.numpy as jnp
from jax.experimental import pallas as pl
from jax.experimental.pallas import tpu as pltpu

LANE = 128      # TPU lane width; everything is padded out to this in the lane dim.
HIDDEN = 24     # hidden width of the DQN MLP


def _round_up(n, m):
    return (n + m - 1) // m * m


# ----------------------------------------------------------------------------
# Parameter packing: one (R, 128) f32 slab, each region 8-sublane aligned.
# ----------------------------------------------------------------------------
def _pad2d(a, rows, cols):
    out = jnp.zeros((rows, cols), jnp.float32)
    return out.at[: a.shape[0], : a.shape[1]].set(a.astype(jnp.float32))


def pack_params(params, state_size):
    """Concatenate (w1,b1,w2,b2,w3,b3) into a single lane-padded slab.

    Returns (slab, offsets) where offsets maps name -> starting row (static ints).
    Zero padding is semantically inert: padded weight rows/cols and bias lanes are
    zero, so padded hidden lanes stay exactly 0 through ReLU and the padded output
    lanes are 0 (sliced off in the wrapper).
    """
    w1, b1, w2, b2, w3, b3 = params
    s_pad = _round_up(max(state_size, 1), 8)
    pieces = [
        ("w1", _pad2d(w1, s_pad, LANE)),   # (state_size, 24)  -> (s_pad, 128)
        ("b1", _pad2d(b1, 8, LANE)),       # (1, 24)           -> (8, 128), row 0
        ("w2", _pad2d(w2, LANE, LANE)),    # (24, 24)          -> (128, 128)
        ("b2", _pad2d(b2, 8, LANE)),
        ("w3", _pad2d(w3, LANE, LANE)),    # (24, action_size) -> (128, 128)
        ("b3", _pad2d(b3, 8, LANE)),
    ]
    offsets, row = {}, 0
    for name, blk in pieces:
        offsets[name] = row
        row += blk.shape[0]
    slab = jnp.concatenate([blk for _, blk in pieces], axis=0)  # (R, 128), R % 8 == 0
    return slab, offsets


# ----------------------------------------------------------------------------
# Kernel: one batch tile (TB, state_size) -> (TB, 128) lane-dense logits.
# ----------------------------------------------------------------------------
def dqn_kernel(x_ref, p_ref, o_ref, *, state_size, offs):
    x = x_ref[...]                       # (TB, state_size) f32
    tb = x.shape[0]
    r_w1, r_b1 = offs["w1"], offs["b1"]
    r_w2, r_b2 = offs["w2"], offs["b2"]
    r_w3, r_b3 = offs["w3"], offs["b3"]

    # ---- layer 1 on the VPU: K = state_size rank-1 updates (no tiny-K MXU op) --
    acc = jnp.broadcast_to(p_ref[r_b1:r_b1 + 1, :], (tb, LANE))
    for k in range(state_size):                       # static, unrolled (K is tiny)
        acc = acc + x[:, k:k + 1] * p_ref[r_w1 + k:r_w1 + k + 1, :]
    h1 = jnp.maximum(acc, 0.0)                        # (TB, 128); lanes >= 24 are 0

    # ---- layer 2 on the MXU: (TB,128) @ (128,128), zero-padded ----------------
    h2 = jnp.dot(h1, p_ref[r_w2:r_w2 + LANE, :],
                 preferred_element_type=jnp.float32) + p_ref[r_b2:r_b2 + 1, :]
    h2 = jnp.maximum(h2, 0.0)

    # ---- layer 3 on the MXU: N padded to 128 -> lane-dense output store -------
    out = jnp.dot(h2, p_ref[r_w3:r_w3 + LANE, :],
                  preferred_element_type=jnp.float32) + p_ref[r_b3:r_b3 + 1, :]
    o_ref[...] = out.astype(o_ref.dtype)


# ----------------------------------------------------------------------------
# Wrapper
# ----------------------------------------------------------------------------
def dqn_forward(x, params, *, block_batch=512):
    """y = fc3(relu(fc2(relu(fc1(x))))), x: (batch, state_size) f32."""
    batch, state_size = x.shape
    action_size = params[4].shape[1]

    slab, offs = pack_params(params, state_size)
    rows = slab.shape[0]

    # Batch tiling: TB rows per grid step (sublane-dense), batch padded to a
    # multiple of TB with zero rows (sliced off afterwards).
    tb = min(block_batch, _round_up(batch, 8))
    padded_batch = _round_up(batch, tb)
    x = x.astype(jnp.float32)
    if padded_batch != batch:
        x = jnp.pad(x, ((0, padded_batch - batch), (0, 0)))
    num_blocks = padded_batch // tb

    kernel = functools.partial(dqn_kernel, state_size=state_size, offs=offs)

    out = pl.pallas_call(
        kernel,
        out_shape=jax.ShapeDtypeStruct((padded_batch, LANE), jnp.float32),
        grid=(num_blocks,),
        in_specs=[
            pl.BlockSpec((tb, state_size), lambda i: (i, 0)),   # batch tile of x
            pl.BlockSpec((rows, LANE), lambda i: (0, 0)),       # resident param slab
        ],
        out_specs=pl.BlockSpec((tb, LANE), lambda i: (i, 0)),   # lane-dense logits
        compiler_params=pltpu.CompilerParams(
            dimension_semantics=("parallel",)),                 # shards across TCs on v7x
    )(x, slab)

    return out[:batch, :action_size]


# ----------------------------------------------------------------------------
# Init + pure-JAX reference (PyTorch nn.Linear default init, weights (in, out)).
# ----------------------------------------------------------------------------
def init_dqn_params(key, state_size, action_size):
    def linear(key, fan_in, fan_out):
        kw, kb = jax.random.split(key)
        bound = 1.0 / jnp.sqrt(jnp.float32(fan_in))
        w = jax.random.uniform(kw, (fan_in, fan_out), jnp.float32, -bound, bound)
        b = jax.random.uniform(kb, (1, fan_out), jnp.float32, -bound, bound)
        return w, b

    k1, k2, k3 = jax.random.split(key, 3)
    w1, b1 = linear(k1, state_size, HIDDEN)
    w2, b2 = linear(k2, HIDDEN, HIDDEN)
    w3, b3 = linear(k3, HIDDEN, action_size)
    return (w1, b1, w2, b2, w3, b3)


def dqn_reference(x, params):
    w1, b1, w2, b2, w3, b3 = params
    h1 = jnp.maximum(x @ w1 + b1, 0.0)
    h2 = jnp.maximum(h1 @ w2 + b2, 0.0)
    return h2 @ w3 + b3


if __name__ == "__main__":
    state_size, action_size = 4, 2   # CartPole

    key = jax.random.PRNGKey(0)
    k_params, k_x = jax.random.split(key)
    params = init_dqn_params(k_params, state_size, action_size)

    # Small "act()" batch and a replay-buffer-sized batch (exercises the batch
    # grid, batch padding and output slicing paths).
    for batch in (8, 600):
        kx = jax.random.fold_in(k_x, batch)
        x = jax.random.normal(kx, (batch, state_size), dtype=jnp.float32)

        out = jax.block_until_ready(dqn_forward(x, params))
        ref = dqn_reference(x, params)

        assert out.shape == (batch, action_size), out.shape
        # Tolerance note: the XLA reference uses TPU default matmul precision
        # (bf16 MXU passes) while layer 1 in the kernel is exact-f32 VPU math,
        # so small ~1e-3-level differences are expected and allowed.
        max_err = jnp.max(jnp.abs(out - ref))
        assert jnp.allclose(out, ref, atol=2e-2, rtol=2e-2), (batch, max_err)

    print("KERNEL_OK")
</pallas_src>

<mosaic_0001>
module attributes {stable_mosaic.version = 11 : i64} {
  func.func @dqn_kernel(%arg0: i32, %arg1: memref<8x4xf32, #tpu.memory_space<vmem>>, %arg2: memref<288x128xf32, #tpu.memory_space<vmem>>, %arg3: memref<8x128xf32, #tpu.memory_space<vmem>>) attributes {dimension_semantics = [#tpu.dimension_semantics<parallel>], iteration_bounds = array<i64: 1>, scalar_prefetch = 0 : i64, scratch_operands = 0 : i64, tpu.core_type = #tpu.core_type<tc>, window_params = [{transform_indices = @transform_0, window_bounds = array<i64: 8, 4>}, {pipeline_mode = #tpu.pipeline_mode<synchronous>, transform_indices = @transform_1, window_bounds = array<i64: 288, 128>}, {transform_indices = @transform_2, window_bounds = array<i64: 8, 128>}]} {
    %c0 = arith.constant 0 : index
    %c0_0 = arith.constant 0 : index
    %0 = vector.load %arg1[%c0, %c0_0] : memref<8x4xf32, #tpu.memory_space<vmem>>, vector<8x4xf32>
    %c8 = arith.constant 8 : index
    %c0_1 = arith.constant 0 : index
    %1 = vector.load %arg2[%c8, %c0_1] : memref<288x128xf32, #tpu.memory_space<vmem>>, vector<1x128xf32>
    %2 = vector.shape_cast %1 : vector<1x128xf32> to vector<1x128xf32>
    %3 = vector.broadcast %2 : vector<1x128xf32> to vector<8x128xf32>
    %4 = vector.extract_strided_slice %0 {offsets = [0, 0], sizes = [8, 1], strides = [1, 1]} : vector<8x4xf32> to vector<8x1xf32>
    %c0_2 = arith.constant 0 : index
    %c0_3 = arith.constant 0 : index
    %5 = vector.load %arg2[%c0_2, %c0_3] : memref<288x128xf32, #tpu.memory_space<vmem>>, vector<1x128xf32>
    %6 = vector.broadcast %4 : vector<8x1xf32> to vector<8x128xf32>
    %7 = vector.broadcast %5 : vector<1x128xf32> to vector<8x128xf32>
    %8 = arith.mulf %6, %7 : vector<8x128xf32>
    %9 = arith.addf %3, %8 : vector<8x128xf32>
    %10 = vector.extract_strided_slice %0 {offsets = [0, 1], sizes = [8, 1], strides = [1, 1]} : vector<8x4xf32> to vector<8x1xf32>
    %c1 = arith.constant 1 : index
    %c0_4 = arith.constant 0 : index
    %11 = vector.load %arg2[%c1, %c0_4] : memref<288x128xf32, #tpu.memory_space<vmem>>, vector<1x128xf32>
    %12 = vector.broadcast %10 : vector<8x1xf32> to vector<8x128xf32>
    %13 = vector.broadcast %11 : vector<1x128xf32> to vector<8x128xf32>
    %14 = arith.mulf %12, %13 : vector<8x128xf32>
    %15 = arith.addf %9, %14 : vector<8x128xf32>
    %16 = vector.extract_strided_slice %0 {offsets = [0, 2], sizes = [8, 1], strides = [1, 1]} : vector<8x4xf32> to vector<8x1xf32>
    %c2 = arith.constant 2 : index
    %c0_5 = arith.constant 0 : index
    %17 = vector.load %arg2[%c2, %c0_5] : memref<288x128xf32, #tpu.memory_space<vmem>>, vector<1x128xf32>
    %18 = vector.broadcast %16 : vector<8x1xf32> to vector<8x128xf32>
    %19 = vector.broadcast %17 : vector<1x128xf32> to vector<8x128xf32>
    %20 = arith.mulf %18, %19 : vector<8x128xf32>
    %21 = arith.addf %15, %20 : vector<8x128xf32>
    %22 = vector.extract_strided_slice %0 {offsets = [0, 3], sizes = [8, 1], strides = [1, 1]} : vector<8x4xf32> to vector<8x1xf32>
    %c3 = arith.constant 3 : index
    %c0_6 = arith.constant 0 : index
    %23 = vector.load %arg2[%c3, %c0_6] : memref<288x128xf32, #tpu.memory_space<vmem>>, vector<1x128xf32>
    %24 = vector.broadcast %22 : vector<8x1xf32> to vector<8x128xf32>
    %25 = vector.broadcast %23 : vector<1x128xf32> to vector<8x128xf32>
    %26 = arith.mulf %24, %25 : vector<8x128xf32>
    %27 = arith.addf %21, %26 : vector<8x128xf32>
    %cst = arith.constant 0.000000e+00 : f32
    %28 = vector.broadcast %cst : f32 to vector<8x128xf32>
    %29 = arith.maximumf %27, %28 : vector<8x128xf32>
    %c16 = arith.constant 16 : index
    %c0_7 = arith.constant 0 : index
    %30 = vector.load %arg2[%c16, %c0_7] : memref<288x128xf32, #tpu.memory_space<vmem>>, vector<128x128xf32>
    %cst_8 = arith.constant dense<0.000000e+00> : vector<8x128xf32>
    %31 = tpu.matmul %29, %30, %cst_8 {dimension_numbers = #tpu.dot_dimension_numbers<[1], [0], [0], [1], [0, 0, 1, 1], [], []>} : vector<8x128xf32>, vector<128x128xf32>, vector<8x128xf32> -> vector<8x128xf32>
    %c144 = arith.constant 144 : index
    %c0_9 = arith.constant 0 : index
    %32 = vector.load %arg2[%c144, %c0_9] : memref<288x128xf32, #tpu.memory_space<vmem>>, vector<1x128xf32>
    %33 = vector.broadcast %32 : vector<1x128xf32> to vector<8x128xf32>
    %34 = arith.addf %31, %33 : vector<8x128xf32>
    %cst_10 = arith.constant 0.000000e+00 : f32
    %35 = vector.broadcast %cst_10 : f32 to vector<8x128xf32>
    %36 = arith.maximumf %34, %35 : vector<8x128xf32>
    %c152 = arith.constant 152 : index
    %c0_11 = arith.constant 0 : index
    %37 = vector.load %arg2[%c152, %c0_11] : memref<288x128xf32, #tpu.memory_space<vmem>>, vector<128x128xf32>
    %cst_12 = arith.constant dense<0.000000e+00> : vector<8x128xf32>
    %38 = tpu.matmul %36, %37, %cst_12 {dimension_numbers = #tpu.dot_dimension_numbers<[1], [0], [0], [1], [0, 0, 1, 1], [], []>} : vector<8x128xf32>, vector<128x128xf32>, vector<8x128xf32> -> vector<8x128xf32>
    %c280 = arith.constant 280 : index
    %c0_13 = arith.constant 0 : index
    %39 = vector.load %arg2[%c280, %c0_13] : memref<288x128xf32, #tpu.memory_space<vmem>>, vector<1x128xf32>
    %40 = vector.broadcast %39 : vector<1x128xf32> to vector<8x128xf32>
    %41 = arith.addf %38, %40 : vector<8x128xf32>
    %c0_14 = arith.constant 0 : index
    %c0_15 = arith.constant 0 : index
    %42 = vector.load %arg3[%c0_14, %c0_15] : memref<8x128xf32, #tpu.memory_space<vmem>>, vector<8x128xf32>
    tpu.vector_store %arg3[%c0_14, %c0_15], %41 {strides = array<i32>} : memref<8x128xf32, #tpu.memory_space<vmem>>, vector<8x128xf32>,
    return
  }
  func.func @transform_0(%arg0: i32) -> (i32, i32) {
    %c0_i32 = arith.constant 0 : i32
    %c0_i32_0 = arith.constant 0 : i32
    return %arg0, %c0_i32 : i32, i32
  }
  func.func @transform_1(%arg0: i32) -> (i32, i32) {
    %c0_i32 = arith.constant 0 : i32
    %c0_i32_0 = arith.constant 0 : i32
    %c0_i32_1 = arith.constant 0 : i32
    return %c0_i32, %c0_i32_0 : i32, i32
  }
  func.func @transform_2(%arg0: i32) -> (i32, i32) {
    %c0_i32 = arith.constant 0 : i32
    %c0_i32_0 = arith.constant 0 : i32
    return %arg0, %c0_i32 : i32, i32
  }
}

</mosaic_0001>

<llo_original>
// kernel: tpu_custom_call.1
$region0: #{tpu_custom_call.1}
  #allocation0 [shape = 'u32[]', space=smem, size = 0x4, offset = 0x4, fixed_abs, tag = 'smem constant byte address 0x4 - core index']
  #allocation1 [shape = 'u32[72,128]{1,0:T(1,128)}', space=vmem, size = 0x9000, scoped, tag = 'internal scratch']
  %s0 = inlined_call_operand.vmem [shape: f32[8,4], index: 0, kind: input, shape index: {}]
  %s1 = inlined_call_operand.hbm [shape: f32[288,128], index: 1, kind: input, shape index: {}]
  %s2 = inlined_call_operand.hbm [shape: f32[8,128], index: 2, kind: output, shape index: {}]
  %s3 = sld [smem:[#allocation0]]
  $region22: #{tpu_custom_call.1} parent=0
    _
  %s5 = ssub.s32 1, %s3
  %s6 = scalar_select 0, %s5, %s3
  $region1: #{tpu_custom_call.1} parent=0
    #allocation2 [shape = 'u8[147456]{0}', space=vmem, size = 0x24000, scoped, tag = 'input window, operand 1, single buffered']
    #allocation3 [shape = 's32[1]{0}', space=sflag, size = 0x4, scoped, tag = 'scoped memory for tpu_custom_call.1']
    #allocation4 [shape = 's32[1]{0}', space=sflag, size = 0x4, scoped, tag = 'scoped memory for tpu_custom_call.1']
    #allocation5 [shape = 'u8[4096]{0}', space=vmem, size = 0x1000, scoped, tag = 'output window, operand 0, single buffered']
    %7 = vsyncpa [#allocation3], 0
    %8 = vsyncpa [#allocation4], 0
    // Predicated region
    $region2: #{tpu_custom_call.1} parent=1 // pred_check
      _
    $region3: #{tpu_custom_call.1} parent=1 // pred_check_branch
      %10 = sbr.rel (0) target = $region5
    $region4: #{tpu_custom_call.1} parent=1 // pred_region
      _
    $region5: #{tpu_custom_call.1} parent=1 // pred_fallthru
      _
    // Predicated region
    $region6: #{tpu_custom_call.1} parent=1 // pred_check
      _
    $region7: #{tpu_custom_call.1} parent=1 // pred_check_branch
      %12 = sbr.rel (0) target = $region9
    $region8: #{tpu_custom_call.1} parent=1 // pred_region
      %14 = vsyncadd [#allocation3], 0
      %s15 = sshll.u32 %s1, 4
      %s16 = int_to_ptr.hbm [resolvable:$true] %s15
      %s17 = sshll.u32 [#allocation2], 4
      %s18 = int_to_ptr.vmem [resolvable:$true] %s17
      %23 = dma.hbm_to_vmem [thread:$0]  %s16, 4608, %s18, [#allocation3], 128, 128, 8
    $region9: #{tpu_custom_call.1} parent=1 // pred_fallthru
      _
    // Predicated region
    $region10: #{tpu_custom_call.1} parent=1 // pred_check
      _
    $region11: #{tpu_custom_call.1} parent=1 // pred_check_branch
      %25 = sbr.rel (0) target = $region13
    $region12: #{tpu_custom_call.1} parent=1 // pred_region
      %27 = dma.done [#allocation3], 4608
    $region13: #{tpu_custom_call.1} parent=1 // pred_fallthru
      _
    %v28 = vld [vmem:[%s0] sm:$0xff]
    %v29 = vld [vmem:[#allocation2 + $0x8] sm:$0x1]
    %v30 = vperm.slane %v29, 0
    %v31 = vld [vmem:[#allocation2] sm:$0x1]
    %33 = vset.pattern.permute.xlu0 0
    %34 = vperm.xlu0 %33, %v28
    %v35 = vpop.permute.xlu0 %34
    %v37 = vperm.slane %v31, 0
    %v38 = vmul.f32 %v35, %v37
    %v39 = vadd.f32 %v30, %v38
    %v40 = vld [vmem:[#allocation2 + $0x1] sm:$0x1]
    %41 = vset.pattern.permute.xlu0 1
    %42 = vperm.xlu0 %41, %v28
    %v43 = vpop.permute.xlu0 %42
    %v45 = vperm.slane %v40, 0
    %v46 = vmul.f32 %v43, %v45
    %v47 = vadd.f32 %v39, %v46
    %v48 = vld [vmem:[#allocation2 + $0x2] sm:$0x1]
    %49 = vset.pattern.permute.xlu0 2
    %50 = vperm.xlu0 %49, %v28
    %v51 = vpop.permute.xlu0 %50
    %v53 = vperm.slane %v48, 0
    %v54 = vmul.f32 %v51, %v53
    %v55 = vadd.f32 %v47, %v54
    %v56 = vld [vmem:[#allocation2 + $0x3] sm:$0x1]
    %57 = vset.pattern.permute.xlu0 3
    %58 = vperm.xlu0 %57, %v28
    %v59 = vpop.permute.xlu0 %58
    %v61 = vperm.slane %v56, 0
    %v62 = vmul.f32 %v59, %v61
    %v63 = vadd.f32 %v55, %v62
    %v64 = vmax.f32 %v63, 0.0
    %v65 = vld [vmem:[#allocation2 + $0x10] sm:$0xff]
    %v66 = vld [vmem:[#allocation2 + $0x18] sm:$0xff]
    %v67 = vld [vmem:[#allocation2 + $0x20] sm:$0xff]
    %v68 = vld [vmem:[#allocation2 + $0x28] sm:$0xff]
    %v69 = vld [vmem:[#allocation2 + $0x30] sm:$0xff]
    %v70 = vld [vmem:[#allocation2 + $0x38] sm:$0xff]
    %v71 = vld [vmem:[#allocation2 + $0x40] sm:$0xff]
    %v72 = vld [vmem:[#allocation2 + $0x48] sm:$0xff]
    %v73 = vld [vmem:[#allocation2 + $0x50] sm:$0xff]
    %v74 = vld [vmem:[#allocation2 + $0x58] sm:$0xff]
    %v75 = vld [vmem:[#allocation2 + $0x60] sm:$0xff]
    %v76 = vld [vmem:[#allocation2 + $0x68] sm:$0xff]
    %v77 = vld [vmem:[#allocation2 + $0x70] sm:$0xff]
    %v78 = vld [vmem:[#allocation2 + $0x78] sm:$0xff]
    %v79 = vld [vmem:[#allocation2 + $0x80] sm:$0xff]
    %v80 = vld [vmem:[#allocation2 + $0x88] sm:$0xff]
    %v81 = vld [vmem:[#allocation2 + $0x90] sm:$0x1]
    %v82 = vperm.slane %v81, 0
    %83 = vmatpush.msra.mxu0 %v80
    %84 = vmatpush.msra.mxu0 %v79
    %85 = vmatpush.msra.mxu0 %v78
    %86 = vmatpush.msra.mxu0 %v77
    %87 = vmatpush.msra.mxu0 %v76
    %88 = vmatpush.msra.mxu0 %v75
    %89 = vmatpush.msra.mxu0 %v74
    %90 = vmatpush.msra.mxu0 %v73
    %91 = vmatpush.msra.mxu0 %v72
    %92 = vmatpush.msra.mxu0 %v71
    %93 = vmatpush.msra.mxu0 %v70
    %94 = vmatpush.msra.mxu0 %v69
    %95 = vmatpush.msra.mxu0 %v68
    %96 = vmatpush.msra.mxu0 %v67
    %97 = vmatpush.msra.mxu0 %v66
    %98 = vmatpush.msra.mxu0 %v65
    %99 = vmatmul.f32.gmra.mxu0 %v64
    %v100 = vpop.f32.mrf.mxu0
    %v101 = vadd.f32 %v82, %v100
    %102 = vdwg.mxu0
    %v103 = vmax.f32 %v101, 0.0
    %v104 = vld [vmem:[#allocation2 + $0x98] sm:$0xff]
    %v105 = vld [vmem:[#allocation2 + $0xa0] sm:$0xff]
    %v106 = vld [vmem:[#allocation2 + $0xa8] sm:$0xff]
    %v107 = vld [vmem:[#allocation2 + $0xb0] sm:$0xff]
    %v108 = vld [vmem:[#allocation2 + $0xb8] sm:$0xff]
    %v109 = vld [vmem:[#allocation2 + $0xc0] sm:$0xff]
    %v110 = vld [vmem:[#allocation2 + $0xc8] sm:$0xff]
    %v111 = vld [vmem:[#allocation2 + $0xd0] sm:$0xff]
    %v112 = vld [vmem:[#allocation2 + $0xd8] sm:$0xff]
    %v113 = vld [vmem:[#allocation2 + $0xe0] sm:$0xff]
    %v114 = vld [vmem:[#allocation2 + $0xe8] sm:$0xff]
    %v115 = vld [vmem:[#allocation2 + $0xf0] sm:$0xff]
    %v116 = vld [vmem:[#allocation2 + $0xf8] sm:$0xff]
    %v117 = vld [vmem:[#allocation2 + $0x100] sm:$0xff]
    %v118 = vld [vmem:[#allocation2 + $0x108] sm:$0xff]
    %v119 = vld [vmem:[#allocation2 + $0x110] sm:$0xff]
    %v120 = vld [vmem:[#allocation2 + $0x118] sm:$0x1]
    %v121 = vperm.slane %v120, 0
    %122 = vmatpush.msra.mxu0 %v119
    %123 = vmatpush.msra.mxu0 %v118
    %124 = vmatpush.msra.mxu0 %v117
    %125 = vmatpush.msra.mxu0 %v116
    %126 = vmatpush.msra.mxu0 %v115
    %127 = vmatpush.msra.mxu0 %v114
    %128 = vmatpush.msra.mxu0 %v113
    %129 = vmatpush.msra.mxu0 %v112
    %130 = vmatpush.msra.mxu0 %v111
    %131 = vmatpush.msra.mxu0 %v110
    %132 = vmatpush.msra.mxu0 %v109
    %133 = vmatpush.msra.mxu0 %v108
    %134 = vmatpush.msra.mxu0 %v107
    %135 = vmatpush.msra.mxu0 %v106
    %136 = vmatpush.msra.mxu0 %v105
    %137 = vmatpush.msra.mxu0 %v104
    %138 = vmatmul.f32.gmra.mxu0 %v103
    %v139 = vpop.f32.mrf.mxu0
    %v140 = vadd.f32 %v121, %v139
    %141 = vdwg.mxu0
    %142 = vst [vmem:[#allocation5] sm:$0xff] %v140
    // Predicated region
    $region14: #{tpu_custom_call.1} parent=1 // pred_check
      _
    $region15: #{tpu_custom_call.1} parent=1 // pred_check_branch
      %144 = sbr.rel (0) target = $region17
    $region16: #{tpu_custom_call.1} parent=1 // pred_region
      %146 = vsyncadd [#allocation4], 0
      %s148 = sshll.u32 [#allocation5], 4
      %s149 = int_to_ptr.vmem [resolvable:$true] %s148
      %s150 = sshll.u32 %s2, 4
      %s151 = int_to_ptr.hbm [resolvable:$true] %s150
      %153 = dma.vmem_to_hbm [thread:$0]  %s149, 128, %s151, [#allocation4]
    $region17: #{tpu_custom_call.1} parent=1 // pred_fallthru
      _
    // Predicated region
    $region18: #{tpu_custom_call.1} parent=1 // pred_check
      _
    $region19: #{tpu_custom_call.1} parent=1 // pred_check_branch
      %155 = sbr.rel (0) target = $region21
    $region20: #{tpu_custom_call.1} parent=1 // pred_region
      %157 = dma.done [#allocation4], 128
    $region21: #{tpu_custom_call.1} parent=1 // pred_fallthru
      _
    %158 = vsyncpa [#allocation3], 1
    %159 = vsyncpa [#allocation4], 1

</llo_original>
